<compile_context>
chip_gen: v6e
topology: v6e:2x2x1
jax: 0.10.0
libtpu: 0.0.40
codegen_flags: <defaults>
</compile_context>

<pallas_src>
import functools

import jax
import jax.numpy as jnp
import numpy as np
from jax import lax
from jax.experimental import pallas as pl
from jax.experimental.pallas import tpu as pltpu


_LANE_TARGET = 512          # ~512-lane blocks: measured HBM-roofline sweet spot
_SUBLANE = 8


def _conv1d_gn_mish_kernel(x_ref, w_ref, b_ref, gamma_ref, beta_ref,
                           mask_ref, grp_ref, gbc_ref, seg_ref, sbc_ref,
                           o_ref, *, k_taps, pad, inv_n, eps):
    # x_ref   : (C_in_p, L)        channels x (batch_block * time)
    # w_ref   : (C_out, K*C_in_p)  conv weight, tap-major columns
    # b/gamma/beta_ref : (C_out, 1)
    # mask_ref: (K, L)             1.0 where tap k stays inside its batch segment
    # grp_ref : (2G, 2C_out)       block-diag group-sum matrix for [sum ; sumsq]
    # gbc_ref : (C_out, G)         group -> channel broadcast
    # seg_ref : (L, B_blk)         lane -> batch-segment reduction
    # sbc_ref : (B_blk, L)         batch-segment -> lane broadcast
    # o_ref   : (C_out, L)
    x = x_ref[...]
    masks = mask_ref[...].astype(x.dtype)

    # ---- Conv1d: K shifted+masked taps stacked, then ONE MXU matmul -------
    taps = []
    for k in range(k_taps):                         # static, unrolled
        off = k - pad
        # jnp.roll (static shift) lowers to lane slice+concat; the mask zeroes
        # positions that would cross a batch boundary ("same" zero padding).
        tap = x if off == 0 else jnp.roll(x, -off, axis=1)
        taps.append(tap * masks[k:k + 1, :])
    rhs = jnp.concatenate(taps, axis=0)             # (K*C_in_p, L)
    acc = jnp.dot(w_ref[...], rhs, preferred_element_type=jnp.float32)
    acc = acc + b_ref[...]                          # (C_out, L) f32

    # ---- GroupNorm: one pass (sum & sum-of-squares), lane-dense reduces ---
    c_out = o_ref.shape[0]
    n_grp = grp_ref.shape[0] // 2
    both = jnp.concatenate([acc, acc * acc], axis=0)            # (2C_out, L)
    g_lane = jnp.dot(grp_ref[...], both,
                     preferred_element_type=jnp.float32)        # (2G, L)
    g_seg = jnp.dot(g_lane, seg_ref[...],
                    preferred_element_type=jnp.float32)         # (2G, B_blk)
    mean = g_seg[:n_grp] * inv_n                                # (G, B_blk)
    var = g_seg[n_grp:] * inv_n - mean * mean
    rstd = lax.rsqrt(var + eps)
    mean_c = jnp.dot(gbc_ref[...], mean,
                     preferred_element_type=jnp.float32)        # (C_out, B_blk)
    rstd_c = jnp.dot(gbc_ref[...], rstd,
                     preferred_element_type=jnp.float32)        # (C_out, B_blk)
    scale_c = gamma_ref[...] * rstd_c
    shift_c = beta_ref[...] - mean_c * scale_c
    ss = jnp.dot(jnp.concatenate([scale_c, shift_c], axis=0), sbc_ref[...],
                 preferred_element_type=jnp.float32)            # (2C_out, L)
    y = acc * ss[:c_out] + ss[c_out:]

    # ---- Mish: y*tanh(softplus(y)) == y*u/(u+2), u = e^y (e^y + 2) --------
    # Clamp before exp: for y > 20, tanh(softplus(y)) == 1 to f32 precision.
    t = jnp.exp(jnp.minimum(y, 20.0))
    u = t * (t + 2.0)
    # pl.reciprocal(..., approx=True) is cheaper still when tolerance allows.
    out = y * u * pl.reciprocal(u + 2.0, approx=False)
    o_ref[...] = out.astype(o_ref.dtype)


def _pick_batch_block(batch, t):
    """Largest divisor of `batch` whose lane width (d*t) is a multiple of 128
    and within the lane target; otherwise fall back to a single block covering
    the whole (batch*time) axis (legal: block equals full array dim)."""
    best = None
    for d in range(1, batch + 1):
        if batch % d == 0 and (d * t) % 128 == 0 and d * t <= max(_LANE_TARGET, t):
            best = d
    return best if best is not None else batch


def conv1d_block(x, w, b, gamma, beta, *, n_groups=8, eps=1e-5,
                 compute_dtype=jnp.float32):
    """Conv1d(padding=K//2) -> GroupNorm(n_groups) -> Mish.

    x: (B, C_in, T), w: (C_out, C_in, K), b/gamma/beta: (C_out,).
    compute_dtype: dtype for the conv matmul operands (jnp.bfloat16 runs the
    MXU in its native mode when accuracy permits; accumulation stays f32).
    """
    batch, c_in, t = x.shape
    c_out, c_in_w, k_taps = w.shape
    if c_in_w != c_in:
        raise ValueError("weight / input channel mismatch")
    if k_taps % 2 != 1:
        raise ValueError("kernel_size must be odd for 'same' padding=K//2")
    if c_out % n_groups != 0:
        raise ValueError("out_channels must be divisible by n_groups")
    pad = k_taps // 2
    cpg = c_out // n_groups

    b_blk = _pick_batch_block(batch, t)
    l_blk = b_blk * t
    n_blocks = batch // b_blk

    # Pad channels to a sublane multiple so the in-kernel tap stack is aligned.
    c_in_p = ((c_in + _SUBLANE - 1) // _SUBLANE) * _SUBLANE

    # ---- layout plumbing (one fused XLA copy; no conv padding of x) -------
    x2 = jnp.transpose(x, (1, 0, 2)).reshape(c_in, batch * t)
    x2 = jnp.pad(x2, ((0, c_in_p - c_in), (0, 0))).astype(compute_dtype)
    w_p = jnp.pad(w, ((0, 0), (0, c_in_p - c_in), (0, 0)))
    w_flat = jnp.transpose(w_p, (0, 2, 1)).reshape(c_out, k_taps * c_in_p)
    w_flat = w_flat.astype(compute_dtype)
    b2 = b.reshape(c_out, 1).astype(jnp.float32)
    g2 = gamma.reshape(c_out, 1).astype(jnp.float32)
    be2 = beta.reshape(c_out, 1).astype(jnp.float32)

    # ---- grid-invariant constants, hoisted out of the kernel --------------
    pos = np.arange(l_blk) % t
    masks = np.stack(
        [((pos + (kk - pad) >= 0) & (pos + (kk - pad) < t))
         for kk in range(k_taps)]).astype(np.float32)              # (K, L)
    assign = (np.arange(c_out) // cpg ==
              np.arange(n_groups)[:, None]).astype(np.float32)     # (G, C_out)
    grp = np.zeros((2 * n_groups, 2 * c_out), np.float32)
    grp[:n_groups, :c_out] = assign
    grp[n_groups:, c_out:] = assign                                # block-diag
    gbc = np.ascontiguousarray(assign.T)                           # (C_out, G)
    segb = (np.arange(l_blk) // t ==
            np.arange(b_blk)[:, None]).astype(np.float32)          # (B_blk, L)
    seg = np.ascontiguousarray(segb.T)                             # (L, B_blk)

    kernel = functools.partial(
        _conv1d_gn_mish_kernel, k_taps=k_taps, pad=pad,
        inv_n=1.0 / float(cpg * t), eps=float(eps))

    const = lambda i: (0, 0)
    out2 = pl.pallas_call(
        kernel,
        out_shape=jax.ShapeDtypeStruct((c_out, batch * t), x.dtype),
        grid_spec=pltpu.PrefetchScalarGridSpec(
            num_scalar_prefetch=0,
            grid=(n_blocks,),
            in_specs=[
                pl.BlockSpec((c_in_p, l_blk), lambda i: (0, i)),
                pl.BlockSpec((c_out, k_taps * c_in_p), const),
                pl.BlockSpec((c_out, 1), const),
                pl.BlockSpec((c_out, 1), const),
                pl.BlockSpec((c_out, 1), const),
                pl.BlockSpec((k_taps, l_blk), const),
                pl.BlockSpec((2 * n_groups, 2 * c_out), const),
                pl.BlockSpec((c_out, n_groups), const),
                pl.BlockSpec((l_blk, b_blk), const),
                pl.BlockSpec((b_blk, l_blk), const),
            ],
            out_specs=pl.BlockSpec((c_out, l_blk), lambda i: (0, i)),
        ),
        compiler_params=pltpu.CompilerParams(
            # batch blocks are independent -> shard across v7x's 2 TCs
            dimension_semantics=("parallel",),
            vmem_limit_bytes=48 * 1024 * 1024,
        ),
    )(x2, w_flat, b2, g2, be2,
      jnp.asarray(masks), jnp.asarray(grp), jnp.asarray(gbc),
      jnp.asarray(seg), jnp.asarray(segb))

    # undo the layout plumbing: (C_out, B*T) -> (B, C_out, T)
    return jnp.transpose(out2.reshape(c_out, batch, t), (1, 0, 2))


def _reference(x, w, b, gamma, beta, n_groups, eps=1e-5):
    """Pure-JAX reference matching PyTorch Conv1d -> GroupNorm -> Mish."""
    pad = w.shape[-1] // 2
    y = lax.conv_general_dilated(x, w, (1,), [(pad, pad)],
                                 dimension_numbers=("NCH", "OIH", "NCH"))
    y = y + b[None, :, None]
    B, C, T = y.shape
    g = y.reshape(B, n_groups, -1)
    mean = g.mean(-1, keepdims=True)
    var = ((g - mean) ** 2).mean(-1, keepdims=True)
    g = (g - mean) / jnp.sqrt(var + eps)
    y = g.reshape(B, C, T) * gamma[None, :, None] + beta[None, :, None]
    return y * jnp.tanh(jax.nn.softplus(y))


if __name__ == "__main__":
    B, C_in, C_out, T, K, n_groups = 2, 4, 16, 16, 3, 8

    key = jax.random.PRNGKey(0)
    k1, k2, k3 = jax.random.split(key, 3)
    x = jax.random.normal(k1, (B, C_in, T), jnp.float32)

    # Deterministic synthetic params (PyTorch Conv1d-style uniform init).
    fan_in = C_in * K
    bound = 1.0 / float(np.sqrt(fan_in))
    w = jax.random.uniform(k2, (C_out, C_in, K), jnp.float32, -bound, bound)
    b = jax.random.uniform(k3, (C_out,), jnp.float32, -bound, bound)
    gamma = jnp.ones((C_out,), jnp.float32)   # GroupNorm default affine init
    beta = jnp.zeros((C_out,), jnp.float32)

    out = conv1d_block(x, w, b, gamma, beta, n_groups=n_groups)
    out = jax.block_until_ready(out)

    ref = _reference(x, w, b, gamma, beta, n_groups)
    np.testing.assert_allclose(np.asarray(out), np.asarray(ref),
                               rtol=1e-4, atol=1e-4)
    print("KERNEL_OK")
</pallas_src>

<mosaic_0001>
module attributes {stable_mosaic.version = 11 : i64} {
  func.func @_conv1d_gn_mish_kernel(%arg0: i32, %arg1: memref<8x32xf32, #tpu.memory_space<vmem>>, %arg2: memref<16x24xf32, #tpu.memory_space<vmem>>, %arg3: memref<16x1xf32, #tpu.memory_space<vmem>>, %arg4: memref<16x1xf32, #tpu.memory_space<vmem>>, %arg5: memref<16x1xf32, #tpu.memory_space<vmem>>, %arg6: memref<3x32xf32, #tpu.memory_space<vmem>>, %arg7: memref<16x32xf32, #tpu.memory_space<vmem>>, %arg8: memref<16x8xf32, #tpu.memory_space<vmem>>, %arg9: memref<32x2xf32, #tpu.memory_space<vmem>>, %arg10: memref<2x32xf32, #tpu.memory_space<vmem>>, %arg11: memref<16x32xf32, #tpu.memory_space<vmem>>) attributes {dimension_semantics = [#tpu.dimension_semantics<parallel>], iteration_bounds = array<i64: 1>, scalar_prefetch = 0 : i64, scratch_operands = 0 : i64, tpu.core_type = #tpu.core_type<tc>, window_params = [{transform_indices = @transform_0, window_bounds = array<i64: 8, 32>}, {pipeline_mode = #tpu.pipeline_mode<synchronous>, transform_indices = @transform_1, window_bounds = array<i64: 16, 24>}, {pipeline_mode = #tpu.pipeline_mode<synchronous>, transform_indices = @transform_2, window_bounds = array<i64: 16, 1>}, {pipeline_mode = #tpu.pipeline_mode<synchronous>, transform_indices = @transform_3, window_bounds = array<i64: 16, 1>}, {pipeline_mode = #tpu.pipeline_mode<synchronous>, transform_indices = @transform_4, window_bounds = array<i64: 16, 1>}, {pipeline_mode = #tpu.pipeline_mode<synchronous>, transform_indices = @transform_5, window_bounds = array<i64: 3, 32>}, {pipeline_mode = #tpu.pipeline_mode<synchronous>, transform_indices = @transform_6, window_bounds = array<i64: 16, 32>}, {pipeline_mode = #tpu.pipeline_mode<synchronous>, transform_indices = @transform_7, window_bounds = array<i64: 16, 8>}, {pipeline_mode = #tpu.pipeline_mode<synchronous>, transform_indices = @transform_8, window_bounds = array<i64: 32, 2>}, {pipeline_mode = #tpu.pipeline_mode<synchronous>, transform_indices = @transform_9, window_bounds = array<i64: 2, 32>}, {transform_indices = @transform_10, window_bounds = array<i64: 16, 32>}]} {
    %c0 = arith.constant 0 : index
    %c0_0 = arith.constant 0 : index
    %0 = vector.load %arg1[%c0, %c0_0] : memref<8x32xf32, #tpu.memory_space<vmem>>, vector<8x32xf32>
    %c0_1 = arith.constant 0 : index
    %c0_2 = arith.constant 0 : index
    %1 = vector.load %arg6[%c0_1, %c0_2] : memref<3x32xf32, #tpu.memory_space<vmem>>, vector<3x32xf32>
    %2 = vector.extract_strided_slice %0 {offsets = [0, 31], sizes = [8, 1], strides = [1, 1]} : vector<8x32xf32> to vector<8x1xf32>
    %3 = vector.extract_strided_slice %0 {offsets = [0, 0], sizes = [8, 31], strides = [1, 1]} : vector<8x32xf32> to vector<8x31xf32>
    %4 = tpu.concatenate %2, %3 in 1 : vector<8x1xf32>, vector<8x31xf32> -> vector<8x32xf32>
    %5 = vector.extract_strided_slice %1 {offsets = [0, 0], sizes = [1, 32], strides = [1, 1]} : vector<3x32xf32> to vector<1x32xf32>
    %6 = vector.broadcast %5 : vector<1x32xf32> to vector<8x32xf32>
    %7 = arith.mulf %4, %6 : vector<8x32xf32>
    %8 = vector.extract_strided_slice %1 {offsets = [1, 0], sizes = [1, 32], strides = [1, 1]} : vector<3x32xf32> to vector<1x32xf32>
    %9 = vector.broadcast %8 : vector<1x32xf32> to vector<8x32xf32>
    %10 = arith.mulf %0, %9 : vector<8x32xf32>
    %11 = vector.extract_strided_slice %0 {offsets = [0, 1], sizes = [8, 31], strides = [1, 1]} : vector<8x32xf32> to vector<8x31xf32>
    %12 = vector.extract_strided_slice %0 {offsets = [0, 0], sizes = [8, 1], strides = [1, 1]} : vector<8x32xf32> to vector<8x1xf32>
    %13 = tpu.concatenate %11, %12 in 1 : vector<8x31xf32>, vector<8x1xf32> -> vector<8x32xf32>
    %14 = vector.extract_strided_slice %1 {offsets = [2, 0], sizes = [1, 32], strides = [1, 1]} : vector<3x32xf32> to vector<1x32xf32>
    %15 = vector.broadcast %14 : vector<1x32xf32> to vector<8x32xf32>
    %16 = arith.mulf %13, %15 : vector<8x32xf32>
    %17 = tpu.concatenate %7, %10, %16 in 0 : vector<8x32xf32>, vector<8x32xf32>, vector<8x32xf32> -> vector<24x32xf32>
    %c0_3 = arith.constant 0 : index
    %c0_4 = arith.constant 0 : index
    %18 = vector.load %arg2[%c0_3, %c0_4] : memref<16x24xf32, #tpu.memory_space<vmem>>, vector<16x24xf32>
    %cst = arith.constant dense<0.000000e+00> : vector<16x32xf32>
    %19 = tpu.matmul %18, %17, %cst {dimension_numbers = #tpu.dot_dimension_numbers<[1], [0], [0], [1], [0, 0, 1, 1], [], []>} : vector<16x24xf32>, vector<24x32xf32>, vector<16x32xf32> -> vector<16x32xf32>
    %c0_5 = arith.constant 0 : index
    %c0_6 = arith.constant 0 : index
    %20 = vector.load %arg3[%c0_5, %c0_6] : memref<16x1xf32, #tpu.memory_space<vmem>>, vector<16x1xf32>
    %21 = vector.broadcast %20 : vector<16x1xf32> to vector<16x32xf32>
    %22 = arith.addf %19, %21 : vector<16x32xf32>
    %23 = arith.mulf %22, %22 : vector<16x32xf32>
    %24 = tpu.concatenate %22, %23 in 0 : vector<16x32xf32>, vector<16x32xf32> -> vector<32x32xf32>
    %c0_7 = arith.constant 0 : index
    %c0_8 = arith.constant 0 : index
    %25 = vector.load %arg7[%c0_7, %c0_8] : memref<16x32xf32, #tpu.memory_space<vmem>>, vector<16x32xf32>
    %cst_9 = arith.constant dense<0.000000e+00> : vector<16x32xf32>
    %26 = tpu.matmul %25, %24, %cst_9 {dimension_numbers = #tpu.dot_dimension_numbers<[1], [0], [0], [1], [0, 0, 1, 1], [], []>} : vector<16x32xf32>, vector<32x32xf32>, vector<16x32xf32> -> vector<16x32xf32>
    %c0_10 = arith.constant 0 : index
    %c0_11 = arith.constant 0 : index
    %27 = vector.load %arg9[%c0_10, %c0_11] : memref<32x2xf32, #tpu.memory_space<vmem>>, vector<32x2xf32>
    %cst_12 = arith.constant dense<0.000000e+00> : vector<16x2xf32>
    %28 = tpu.matmul %26, %27, %cst_12 {dimension_numbers = #tpu.dot_dimension_numbers<[1], [0], [0], [1], [0, 0, 1, 1], [], []>} : vector<16x32xf32>, vector<32x2xf32>, vector<16x2xf32> -> vector<16x2xf32>
    %29 = vector.extract_strided_slice %28 {offsets = [0, 0], sizes = [8, 2], strides = [1, 1]} : vector<16x2xf32> to vector<8x2xf32>
    %cst_13 = arith.constant 3.125000e-02 : f32
    %30 = vector.broadcast %cst_13 : f32 to vector<8x2xf32>
    %31 = arith.mulf %29, %30 : vector<8x2xf32>
    %32 = vector.extract_strided_slice %28 {offsets = [8, 0], sizes = [8, 2], strides = [1, 1]} : vector<16x2xf32> to vector<8x2xf32>
    %cst_14 = arith.constant 3.125000e-02 : f32
    %33 = vector.broadcast %cst_14 : f32 to vector<8x2xf32>
    %34 = arith.mulf %32, %33 : vector<8x2xf32>
    %35 = arith.mulf %31, %31 : vector<8x2xf32>
    %36 = arith.subf %34, %35 : vector<8x2xf32>
    %cst_15 = arith.constant 9.99999974E-6 : f32
    %37 = vector.broadcast %cst_15 : f32 to vector<8x2xf32>
    %38 = arith.addf %36, %37 : vector<8x2xf32>
    %39 = math.rsqrt %38 : vector<8x2xf32>
    %c0_16 = arith.constant 0 : index
    %c0_17 = arith.constant 0 : index
    %40 = vector.load %arg8[%c0_16, %c0_17] : memref<16x8xf32, #tpu.memory_space<vmem>>, vector<16x8xf32>
    %cst_18 = arith.constant dense<0.000000e+00> : vector<16x2xf32>
    %41 = tpu.matmul %40, %31, %cst_18 {dimension_numbers = #tpu.dot_dimension_numbers<[1], [0], [0], [1], [0, 0, 1, 1], [], []>} : vector<16x8xf32>, vector<8x2xf32>, vector<16x2xf32> -> vector<16x2xf32>
    %c0_19 = arith.constant 0 : index
    %c0_20 = arith.constant 0 : index
    %42 = vector.load %arg8[%c0_19, %c0_20] : memref<16x8xf32, #tpu.memory_space<vmem>>, vector<16x8xf32>
    %cst_21 = arith.constant dense<0.000000e+00> : vector<16x2xf32>
    %43 = tpu.matmul %42, %39, %cst_21 {dimension_numbers = #tpu.dot_dimension_numbers<[1], [0], [0], [1], [0, 0, 1, 1], [], []>} : vector<16x8xf32>, vector<8x2xf32>, vector<16x2xf32> -> vector<16x2xf32>
    %c0_22 = arith.constant 0 : index
    %c0_23 = arith.constant 0 : index
    %44 = vector.load %arg4[%c0_22, %c0_23] : memref<16x1xf32, #tpu.memory_space<vmem>>, vector<16x1xf32>
    %45 = vector.broadcast %44 : vector<16x1xf32> to vector<16x2xf32>
    %46 = arith.mulf %45, %43 : vector<16x2xf32>
    %c0_24 = arith.constant 0 : index
    %c0_25 = arith.constant 0 : index
    %47 = vector.load %arg5[%c0_24, %c0_25] : memref<16x1xf32, #tpu.memory_space<vmem>>, vector<16x1xf32>
    %48 = arith.mulf %41, %46 : vector<16x2xf32>
    %49 = vector.broadcast %47 : vector<16x1xf32> to vector<16x2xf32>
    %50 = arith.subf %49, %48 : vector<16x2xf32>
    %51 = tpu.concatenate %46, %50 in 0 : vector<16x2xf32>, vector<16x2xf32> -> vector<32x2xf32>
    %c0_26 = arith.constant 0 : index
    %c0_27 = arith.constant 0 : index
    %52 = vector.load %arg10[%c0_26, %c0_27] : memref<2x32xf32, #tpu.memory_space<vmem>>, vector<2x32xf32>
    %cst_28 = arith.constant dense<0.000000e+00> : vector<32x32xf32>
    %53 = tpu.matmul %51, %52, %cst_28 {dimension_numbers = #tpu.dot_dimension_numbers<[1], [0], [0], [1], [0, 0, 1, 1], [], []>} : vector<32x2xf32>, vector<2x32xf32>, vector<32x32xf32> -> vector<32x32xf32>
    %54 = vector.extract_strided_slice %53 {offsets = [0, 0], sizes = [16, 32], strides = [1, 1]} : vector<32x32xf32> to vector<16x32xf32>
    %55 = arith.mulf %22, %54 : vector<16x32xf32>
    %56 = vector.extract_strided_slice %53 {offsets = [16, 0], sizes = [16, 32], strides = [1, 1]} : vector<32x32xf32> to vector<16x32xf32>
    %57 = arith.addf %55, %56 : vector<16x32xf32>
    %cst_29 = arith.constant 2.000000e+01 : f32
    %58 = vector.broadcast %cst_29 : f32 to vector<16x32xf32>
    %59 = arith.minimumf %57, %58 : vector<16x32xf32>
    %60 = math.exp %59 : vector<16x32xf32>
    %cst_30 = arith.constant 2.000000e+00 : f32
    %61 = vector.broadcast %cst_30 : f32 to vector<16x32xf32>
    %62 = arith.addf %60, %61 : vector<16x32xf32>
    %63 = arith.mulf %60, %62 : vector<16x32xf32>
    %64 = arith.mulf %57, %63 : vector<16x32xf32>
    %cst_31 = arith.constant 2.000000e+00 : f32
    %65 = vector.broadcast %cst_31 : f32 to vector<16x32xf32>
    %66 = arith.addf %63, %65 : vector<16x32xf32>
    %67 = tpu.reciprocal %66 : vector<16x32xf32> -> vector<16x32xf32>
    %68 = arith.mulf %64, %67 : vector<16x32xf32>
    %c0_32 = arith.constant 0 : index
    %c0_33 = arith.constant 0 : index
    %69 = vector.load %arg11[%c0_32, %c0_33] : memref<16x32xf32, #tpu.memory_space<vmem>>, vector<16x32xf32>
    tpu.vector_store %arg11[%c0_32, %c0_33], %68 {strides = array<i32>} : memref<16x32xf32, #tpu.memory_space<vmem>>, vector<16x32xf32>,
    return
  }
  func.func @transform_0(%arg0: i32) -> (i32, i32) {
    %c0_i32 = arith.constant 0 : i32
    %c0_i32_0 = arith.constant 0 : i32
    return %c0_i32, %arg0 : i32, i32
  }
  func.func @transform_1(%arg0: i32) -> (i32, i32) {
    %c0_i32 = arith.constant 0 : i32
    %c0_i32_0 = arith.constant 0 : i32
    %c0_i32_1 = arith.constant 0 : i32
    return %c0_i32, %c0_i32_0 : i32, i32
  }
  func.func @transform_2(%arg0: i32) -> (i32, i32) {
    %c0_i32 = arith.constant 0 : i32
    %c0_i32_0 = arith.constant 0 : i32
    %c0_i32_1 = arith.constant 0 : i32
    return %c0_i32, %c0_i32_0 : i32, i32
  }
  func.func @transform_3(%arg0: i32) -> (i32, i32) {
    %c0_i32 = arith.constant 0 : i32
    %c0_i32_0 = arith.constant 0 : i32
    %c0_i32_1 = arith.constant 0 : i32
    return %c0_i32, %c0_i32_0 : i32, i32
  }
  func.func @transform_4(%arg0: i32) -> (i32, i32) {
    %c0_i32 = arith.constant 0 : i32
    %c0_i32_0 = arith.constant 0 : i32
    %c0_i32_1 = arith.constant 0 : i32
    return %c0_i32, %c0_i32_0 : i32, i32
  }
  func.func @transform_5(%arg0: i32) -> (i32, i32) {
    %c0_i32 = arith.constant 0 : i32
    %c0_i32_0 = arith.constant 0 : i32
    %c0_i32_1 = arith.constant 0 : i32
    return %c0_i32, %c0_i32_0 : i32, i32
  }
  func.func @transform_6(%arg0: i32) -> (i32, i32) {
    %c0_i32 = arith.constant 0 : i32
    %c0_i32_0 = arith.constant 0 : i32
    %c0_i32_1 = arith.constant 0 : i32
    return %c0_i32, %c0_i32_0 : i32, i32
  }
  func.func @transform_7(%arg0: i32) -> (i32, i32) {
    %c0_i32 = arith.constant 0 : i32
    %c0_i32_0 = arith.constant 0 : i32
    %c0_i32_1 = arith.constant 0 : i32
    return %c0_i32, %c0_i32_0 : i32, i32
  }
  func.func @transform_8(%arg0: i32) -> (i32, i32) {
    %c0_i32 = arith.constant 0 : i32
    %c0_i32_0 = arith.constant 0 : i32
    %c0_i32_1 = arith.constant 0 : i32
    return %c0_i32, %c0_i32_0 : i32, i32
  }
  func.func @transform_9(%arg0: i32) -> (i32, i32) {
    %c0_i32 = arith.constant 0 : i32
    %c0_i32_0 = arith.constant 0 : i32
    %c0_i32_1 = arith.constant 0 : i32
    return %c0_i32, %c0_i32_0 : i32, i32
  }
  func.func @transform_10(%arg0: i32) -> (i32, i32) {
    %c0_i32 = arith.constant 0 : i32
    %c0_i32_0 = arith.constant 0 : i32
    return %c0_i32, %arg0 : i32, i32
  }
}

</mosaic_0001>

<llo_original>
// kernel: tpu_custom_call.1
$region0: #{tpu_custom_call.1}
  #allocation0 [shape = 'u32[]', space=smem, size = 0x4, offset = 0x4, fixed_abs, tag = 'smem constant byte address 0x4 - core index']
  #allocation1 [shape = 'u32[144,128]{1,0:T(1,128)}', space=vmem, size = 0x12000, scoped, tag = 'internal scratch']
  %s0 = inlined_call_operand.vmem [shape: f32[8,32], index: 0, kind: input, shape index: {}]
  %s1 = inlined_call_operand.vmem [shape: f32[16,24], index: 1, kind: input, shape index: {}]
  %s2 = inlined_call_operand.vmem [shape: f32[16,1], index: 2, kind: input, shape index: {}]
  %s3 = inlined_call_operand.vmem [shape: f32[16,1], index: 3, kind: input, shape index: {}]
  %s4 = inlined_call_operand.vmem [shape: f32[16,1], index: 4, kind: input, shape index: {}]
  %s5 = inlined_call_operand.vmem [shape: f32[3,32], index: 5, kind: input, shape index: {}]
  %s6 = inlined_call_operand.vmem [shape: f32[16,32], index: 6, kind: input, shape index: {}]
  %s7 = inlined_call_operand.vmem [shape: f32[16,8], index: 7, kind: input, shape index: {}]
  %s8 = inlined_call_operand.vmem [shape: f32[32,2], index: 8, kind: input, shape index: {}]
  %s9 = inlined_call_operand.vmem [shape: f32[2,32], index: 9, kind: input, shape index: {}]
  %s10 = inlined_call_operand.hbm [shape: f32[16,32], index: 10, kind: output, shape index: {}]
  %s11 = sld [smem:[#allocation0]]
  $region50: #{tpu_custom_call.1} parent=0
    _
  %s13 = ssub.s32 1, %s11
  %s14 = scalar_select 0, %s13, %s11
  $region1: #{tpu_custom_call.1} parent=0
    #allocation2 [shape = 'u8[8192]{0}', space=vmem, size = 0x2000, scoped, tag = 'output window, operand 0, single buffered']
    #allocation3 [shape = 's32[1]{0}', space=sflag, size = 0x4, scoped, tag = 'scoped memory for tpu_custom_call.1']
    %15 = vsyncpa [#allocation3], 0
    // Predicated region
    $region2: #{tpu_custom_call.1} parent=1 // pred_check
      _
    $region3: #{tpu_custom_call.1} parent=1 // pred_check_branch
      %17 = sbr.rel (0) target = $region5
    $region4: #{tpu_custom_call.1} parent=1 // pred_region
      _
    $region5: #{tpu_custom_call.1} parent=1 // pred_fallthru
      _
    // Predicated region
    $region6: #{tpu_custom_call.1} parent=1 // pred_check
      _
    $region7: #{tpu_custom_call.1} parent=1 // pred_check_branch
      %19 = sbr.rel (0) target = $region9
    $region8: #{tpu_custom_call.1} parent=1 // pred_region
      _
    $region9: #{tpu_custom_call.1} parent=1 // pred_fallthru
      _
    // Predicated region
    $region10: #{tpu_custom_call.1} parent=1 // pred_check
      _
    $region11: #{tpu_custom_call.1} parent=1 // pred_check_branch
      %21 = sbr.rel (0) target = $region13
    $region12: #{tpu_custom_call.1} parent=1 // pred_region
      _
    $region13: #{tpu_custom_call.1} parent=1 // pred_fallthru
      _
    // Predicated region
    $region14: #{tpu_custom_call.1} parent=1 // pred_check
      _
    $region15: #{tpu_custom_call.1} parent=1 // pred_check_branch
      %23 = sbr.rel (0) target = $region17
    $region16: #{tpu_custom_call.1} parent=1 // pred_region
      _
    $region17: #{tpu_custom_call.1} parent=1 // pred_fallthru
      _
    // Predicated region
    $region18: #{tpu_custom_call.1} parent=1 // pred_check
      _
    $region19: #{tpu_custom_call.1} parent=1 // pred_check_branch
      %25 = sbr.rel (0) target = $region21
    $region20: #{tpu_custom_call.1} parent=1 // pred_region
      _
    $region21: #{tpu_custom_call.1} parent=1 // pred_fallthru
      _
    // Predicated region
    $region22: #{tpu_custom_call.1} parent=1 // pred_check
      _
    $region23: #{tpu_custom_call.1} parent=1 // pred_check_branch
      %27 = sbr.rel (0) target = $region25
    $region24: #{tpu_custom_call.1} parent=1 // pred_region
      _
    $region25: #{tpu_custom_call.1} parent=1 // pred_fallthru
      _
    // Predicated region
    $region26: #{tpu_custom_call.1} parent=1 // pred_check
      _
    $region27: #{tpu_custom_call.1} parent=1 // pred_check_branch
      %29 = sbr.rel (0) target = $region29
    $region28: #{tpu_custom_call.1} parent=1 // pred_region
      _
    $region29: #{tpu_custom_call.1} parent=1 // pred_fallthru
      _
    // Predicated region
    $region30: #{tpu_custom_call.1} parent=1 // pred_check
      _
    $region31: #{tpu_custom_call.1} parent=1 // pred_check_branch
      %31 = sbr.rel (0) target = $region33
    $region32: #{tpu_custom_call.1} parent=1 // pred_region
      _
    $region33: #{tpu_custom_call.1} parent=1 // pred_fallthru
      _
    // Predicated region
    $region34: #{tpu_custom_call.1} parent=1 // pred_check
      _
    $region35: #{tpu_custom_call.1} parent=1 // pred_check_branch
      %33 = sbr.rel (0) target = $region37
    $region36: #{tpu_custom_call.1} parent=1 // pred_region
      _
    $region37: #{tpu_custom_call.1} parent=1 // pred_fallthru
      _
    // Predicated region
    $region38: #{tpu_custom_call.1} parent=1 // pred_check
      _
    $region39: #{tpu_custom_call.1} parent=1 // pred_check_branch
      %35 = sbr.rel (0) target = $region41
    $region40: #{tpu_custom_call.1} parent=1 // pred_region
      _
    $region41: #{tpu_custom_call.1} parent=1 // pred_fallthru
      _
    %v36 = vld [vmem:[%s0] sm:$0xff]
    %v37 = vld [vmem:[%s5] sm:$0x7]
    %39 = vrot.lane.b32.xlu0 %v36, 97
    %v40 = vpop.permute.xlu0 %39
    %42 = vrot.lane.b32.xlu0 %v36, 1
    %v43 = vpop.permute.xlu0 %42
    %vm45 = vcmask 7168
    %v46 = vsel %vm45, %v40, %v43
    %v47 = vlaneseq
    %v48 = vshrl.u32 %v47, 7
    %v49 = vsub.s32 0, %v48
    %v50 = vrot.slane %v37, %v49
    %v51 = vmul.f32 %v46, %v50
    %v52 = vlaneseq
    %v53 = vshrl.u32 %v52, 7
    %v54 = vsub.s32 1, %v53
    %v55 = vrot.slane %v37, %v54
    %v56 = vmul.f32 %v36, %v55
    %57 = vrot.lane.b32.xlu0 %v36, 127
    %v58 = vpop.permute.xlu0 %57
    %60 = vrot.lane.b32.xlu0 %v36, 31
    %v61 = vpop.permute.xlu0 %60
    %vm63 = vcmask 252928
    %v64 = vsel %vm63, %v58, %v61
    %v65 = vlaneseq
    %v66 = vshrl.u32 %v65, 7
    %v67 = vsub.s32 2, %v66
    %v68 = vrot.slane %v37, %v67
    %v69 = vmul.f32 %v64, %v68
    %v70 = vld [vmem:[%s1] sm:$0xff]
    %v71 = vld [vmem:[%s1 + $0x8] sm:$0xff]
    %v72 = vld [vmem:[%s2] sm:$0xff]
    %v73 = vld [vmem:[%s2 + $0x8] sm:$0xff]
    %75 = vset.pattern.permute.xlu0 0
    %76 = vperm.xlu0 %75, %v72
    %v77 = vpop.permute.xlu0 %76
    %80 = vset.pattern.permute.xlu0 0
    %81 = vperm.xlu0 %80, %v73
    %v82 = vpop.permute.xlu0 %81
    %vm84 = vcmask 195584
    %v86 = vsel %vm84, %v70, 0
    %v89 = vsel %vm84, %v71, 0
    %91 = vmatprep.subr.mxu0 0.0
    %92 = vmatpush1.msra.mxu0 0.0
    %93 = vmatprep.subr.mxu0 0.0
    %94 = vmatpush1.msra.mxu0 0.0
    %95 = vmatprep.subr.mxu0 0.0
    %96 = vmatpush1.msra.mxu0 0.0
    %97 = vmatprep.subr.mxu0 0.0
    %98 = vmatpush1.msra.mxu0 0.0
    %99 = vmatprep.subr.mxu0 0.0
    %100 = vmatpush1.msra.mxu0 0.0
    %101 = vmatprep.subr.mxu0 0.0
    %102 = vmatpush1.msra.mxu0 0.0
    %103 = vmatprep.subr.mxu0 0.0
    %104 = vmatpush1.msra.mxu0 0.0
    %105 = vmatprep.subr.mxu0 0.0
    %106 = vmatpush1.msra.mxu0 0.0
    %107 = vmatprep.subr.mxu0 0.0
    %108 = vmatpush1.msra.mxu0 0.0
    %109 = vmatprep.subr.mxu0 0.0
    %110 = vmatpush1.msra.mxu0 0.0
    %111 = vmatprep.subr.mxu0 0.0
    %112 = vmatpush1.msra.mxu0 0.0
    %113 = vmatprep.subr.mxu0 0.0
    %114 = vmatpush1.msra.mxu0 0.0
    %115 = vmatprep.subr.mxu0 0.0
    %116 = vmatpush1.msra.mxu0 0.0
    %117 = vmatprep.subr.mxu0 0.0
    %118 = vmatpush1.msra.mxu0 %v69
    %119 = vmatprep.subr.mxu0 0.0
    %120 = vmatpush1.msra.mxu0 %v56
    %121 = vmatprep.subr.mxu0 0.0
    %122 = vmatpush1.msra.mxu0 %v51
    %123 = vmatprep.subr.mxu0 0.0
    %124 = vmatpush2.msra.mxu0 0.0
    %125 = vmatprep.subr.mxu0 0.0
    %126 = vmatpush2.msra.mxu0 0.0
    %127 = vmatprep.subr.mxu0 0.0
    %128 = vmatpush2.msra.mxu0 0.0
    %129 = vmatprep.subr.mxu0 0.0
    %130 = vmatpush2.msra.mxu0 0.0
    %131 = vmatprep.subr.mxu0 0.0
    %132 = vmatpush2.msra.mxu0 0.0
    %133 = vmatprep.subr.mxu0 0.0
    %134 = vmatpush2.msra.mxu0 0.0
    %135 = vmatprep.subr.mxu0 0.0
    %136 = vmatpush2.msra.mxu0 0.0
    %137 = vmatprep.subr.mxu0 0.0
    %138 = vmatpush2.msra.mxu0 0.0
    %139 = vmatprep.subr.mxu0 0.0
    %140 = vmatpush2.msra.mxu0 0.0
    %141 = vmatprep.subr.mxu0 0.0
    %142 = vmatpush2.msra.mxu0 0.0
    %143 = vmatprep.subr.mxu0 0.0
    %144 = vmatpush2.msra.mxu0 0.0
    %145 = vmatprep.subr.mxu0 0.0
    %146 = vmatpush2.msra.mxu0 0.0
    %147 = vmatprep.subr.mxu0 0.0
    %148 = vmatpush2.msra.mxu0 0.0
    %149 = vmatprep.subr.mxu0 0.0
    %150 = vmatpush2.msra.mxu0 0.0
    %151 = vmatprep.subr.mxu0 0.0
    %152 = vmatpush2.msra.mxu0 0.0
    %153 = vmatprep.subr.mxu0 0.0
    %154 = vmatpush2.msra.mxu0 0.0
    %155 = vmatprep.mubr.f32.mxu0 0.0
    %156 = vmatmul.mubr.f32.gmra.mxu0 %v86
    %v157 = vpop.f32.mrf.mxu0
    %v158 = vadd.f32 %v77, %v157
    %v159 = vpop.f32.mrf.mxu0
    %160 = vmatprep.mubr.f32.mxu0 0.0
    %161 = vmatmul.mubr.f32.gmra.mxu0 %v89
    %v162 = vpop.f32.mrf.mxu0
    %v163 = vadd.f32 %v82, %v162
    %v164 = vpop.f32.mrf.mxu0
    %165 = vdwg.mxu0
    %v166 = vmul.f32 %v158, %v158
    %v167 = vmul.f32 %v163, %v163
    %v168 = vld [vmem:[%s6] sm:$0xff]
    %v169 = vld [vmem:[%s6 + $0x8] sm:$0xff]
    %vm170 = vcmask 261120
    %v172 = vsel %vm170, %v168, 0
    %v175 = vsel %vm170, %v169, 0
    %177 = vmatprep.subr.mxu0 0.0
    %178 = vmatpush1.msra.mxu0 0.0
    %179 = vmatprep.subr.mxu0 0.0
    %180 = vmatpush1.msra.mxu0 0.0
    %181 = vmatprep.subr.mxu0 0.0
    %182 = vmatpush1.msra.mxu0 0.0
    %183 = vmatprep.subr.mxu0 0.0
    %184 = vmatpush1.msra.mxu0 0.0
    %185 = vmatprep.subr.mxu0 0.0
    %186 = vmatpush1.msra.mxu0 0.0
    %187 = vmatprep.subr.mxu0 0.0
    %188 = vmatpush1.msra.mxu0 0.0
    %189 = vmatprep.subr.mxu0 0.0
    %190 = vmatpush1.msra.mxu0 0.0
    %191 = vmatprep.subr.mxu0 0.0
    %192 = vmatpush1.msra.mxu0 0.0
    %193 = vmatprep.subr.mxu0 0.0
    %194 = vmatpush1.msra.mxu0 0.0
    %195 = vmatprep.subr.mxu0 0.0
    %196 = vmatpush1.msra.mxu0 0.0
    %197 = vmatprep.subr.mxu0 0.0
    %198 = vmatpush1.msra.mxu0 0.0
    %199 = vmatprep.subr.mxu0 0.0
    %200 = vmatpush1.msra.mxu0 0.0
    %201 = vmatprep.subr.mxu0 0.0
    %202 = vmatpush1.msra.mxu0 %v167
    %203 = vmatprep.subr.mxu0 0.0
    %204 = vmatpush1.msra.mxu0 %v166
    %205 = vmatprep.subr.mxu0 0.0
    %206 = vmatpush1.msra.mxu0 %v163
    %207 = vmatprep.subr.mxu0 0.0
    %208 = vmatpush1.msra.mxu0 %v158
    %209 = vmatprep.subr.mxu0 0.0
    %210 = vmatpush2.msra.mxu0 0.0
    %211 = vmatprep.subr.mxu0 0.0
    %212 = vmatpush2.msra.mxu0 0.0
    %213 = vmatprep.subr.mxu0 0.0
    %214 = vmatpush2.msra.mxu0 0.0
    %215 = vmatprep.subr.mxu0 0.0
    %216 = vmatpush2.msra.mxu0 0.0
    %217 = vmatprep.subr.mxu0 0.0
    %218 = vmatpush2.msra.mxu0 0.0
    %219 = vmatprep.subr.mxu0 0.0
    %220 = vmatpush2.msra.mxu0 0.0
    %221 = vmatprep.subr.mxu0 0.0
    %222 = vmatpush2.msra.mxu0 0.0
    %223 = vmatprep.subr.mxu0 0.0
    %224 = vmatpush2.msra.mxu0 0.0
    %225 = vmatprep.subr.mxu0 0.0
    %226 = vmatpush2.msra.mxu0 0.0
    %227 = vmatprep.subr.mxu0 0.0
    %228 = vmatpush2.msra.mxu0 0.0
    %229 = vmatprep.subr.mxu0 0.0
    %230 = vmatpush2.msra.mxu0 0.0
    %231 = vmatprep.subr.mxu0 0.0
    %232 = vmatpush2.msra.mxu0 0.0
    %233 = vmatprep.subr.mxu0 0.0
    %234 = vmatpush2.msra.mxu0 0.0
    %235 = vmatprep.subr.mxu0 0.0
    %236 = vmatpush2.msra.mxu0 0.0
    %237 = vmatprep.subr.mxu0 0.0
    %238 = vmatpush2.msra.mxu0 0.0
    %239 = vmatprep.subr.mxu0 0.0
    %240 = vmatpush2.msra.mxu0 0.0
    %241 = vmatprep.mubr.f32.mxu0 0.0
    %242 = vmatmul.mubr.f32.gmra.mxu0 %v172
    %v243 = vpop.f32.mrf.mxu0
    %v244 = vadd.f32 0.0, %v243
    %v245 = vpop.f32.mrf.mxu0
    %246 = vmatprep.mubr.f32.mxu0 0.0
    %247 = vmatmul.mubr.f32.gmra.mxu0 %v175
    %v248 = vpop.f32.mrf.mxu0
    %v249 = vadd.f32 0.0, %v248
    %v250 = vpop.f32.mrf.mxu0
    %251 = vdwg.mxu0
    %v252 = vld [vmem:[%s8] sm:$0xff]
    %v253 = vld [vmem:[%s8 + $0x8] sm:$0xff]
    %v254 = vld [vmem:[%s8 + $0x10] sm:$0xff]
    %v255 = vld [vmem:[%s8 + $0x18] sm:$0xff]
    %v257 = vsel %vm170, %v244, 0
    %v260 = vsel %vm170, %v249, 0
    %262 = vmatprep.subr.mxu0 0.0
    %263 = vmatpush1.msra.mxu0 0.0
    %264 = vmatprep.subr.mxu0 0.0
    %265 = vmatpush1.msra.mxu0 0.0
    %266 = vmatprep.subr.mxu0 0.0
    %267 = vmatpush1.msra.mxu0 0.0
    %268 = vmatprep.subr.mxu0 0.0
    %269 = vmatpush1.msra.mxu0 0.0
    %270 = vmatprep.subr.mxu0 0.0
    %271 = vmatpush1.msra.mxu0 0.0
    %272 = vmatprep.subr.mxu0 0.0
    %273 = vmatpush1.msra.mxu0 0.0
    %274 = vmatprep.subr.mxu0 0.0
    %275 = vmatpush1.msra.mxu0 0.0
    %276 = vmatprep.subr.mxu0 0.0
    %277 = vmatpush1.msra.mxu0 0.0
    %278 = vmatprep.subr.mxu0 0.0
    %279 = vmatpush1.msra.mxu0 0.0
    %280 = vmatprep.subr.mxu0 0.0
    %281 = vmatpush1.msra.mxu0 0.0
    %282 = vmatprep.subr.mxu0 0.0
    %283 = vmatpush1.msra.mxu0 0.0
    %284 = vmatprep.subr.mxu0 0.0
    %285 = vmatpush1.msra.mxu0 0.0
    %286 = vmatprep.subr.mxu0 0.0
    %287 = vmatpush1.msra.mxu0 %v255
    %288 = vmatprep.subr.mxu0 0.0
    %289 = vmatpush1.msra.mxu0 %v254
    %290 = vmatprep.subr.mxu0 0.0
    %291 = vmatpush1.msra.mxu0 %v253
    %292 = vmatprep.subr.mxu0 0.0
    %293 = vmatpush1.msra.mxu0 %v252
    %294 = vmatprep.subr.mxu0 0.0
    %295 = vmatpush2.msra.mxu0 0.0
    %296 = vmatprep.subr.mxu0 0.0
    %297 = vmatpush2.msra.mxu0 0.0
    %298 = vmatprep.subr.mxu0 0.0
    %299 = vmatpush2.msra.mxu0 0.0
    %300 = vmatprep.subr.mxu0 0.0
    %301 = vmatpush2.msra.mxu0 0.0
    %302 = vmatprep.subr.mxu0 0.0
    %303 = vmatpush2.msra.mxu0 0.0
    %304 = vmatprep.subr.mxu0 0.0
    %305 = vmatpush2.msra.mxu0 0.0
    %306 = vmatprep.subr.mxu0 0.0
    %307 = vmatpush2.msra.mxu0 0.0
    %308 = vmatprep.subr.mxu0 0.0
    %309 = vmatpush2.msra.mxu0 0.0
    %310 = vmatprep.subr.mxu0 0.0
    %311 = vmatpush2.msra.mxu0 0.0
    %312 = vmatprep.subr.mxu0 0.0
    %313 = vmatpush2.msra.mxu0 0.0
    %314 = vmatprep.subr.mxu0 0.0
    %315 = vmatpush2.msra.mxu0 0.0
    %316 = vmatprep.subr.mxu0 0.0
    %317 = vmatpush2.msra.mxu0 0.0
    %318 = vmatprep.subr.mxu0 0.0
    %319 = vmatpush2.msra.mxu0 0.0
    %320 = vmatprep.subr.mxu0 0.0
    %321 = vmatpush2.msra.mxu0 0.0
    %322 = vmatprep.subr.mxu0 0.0
    %323 = vmatpush2.msra.mxu0 0.0
    %324 = vmatprep.subr.mxu0 0.0
    %325 = vmatpush2.msra.mxu0 0.0
    %326 = vmatprep.mubr.f32.mxu0 0.0
    %327 = vmatmul.mubr.f32.gmra.mxu0 %v257
    %v328 = vpop.f32.mrf.mxu0
    %v329 = vadd.f32 0.0, %v328
    %v330 = vpop.f32.mrf.mxu0
    %331 = vmatprep.mubr.f32.mxu0 0.0
    %332 = vmatmul.mubr.f32.gmra.mxu0 %v260
    %v333 = vpop.f32.mrf.mxu0
    %v334 = vadd.f32 0.0, %v333
    %v335 = vpop.f32.mrf.mxu0
    %336 = vdwg.mxu0
    %v337 = vmul.f32 %v329, 0.03125
    %v338 = vmul.f32 %v334, 0.03125
    %v339 = vmul.f32 %v337, %v337
    %v340 = vsub.f32 %v338, %v339
    %v341 = vadd.f32 %v340, 1e-05
    %v342 = vrsqrt.pop %v341
    %v343 = vld [vmem:[%s7] sm:$0xff]
    %v344 = vld [vmem:[%s7 + $0x8] sm:$0xff]
    %vm345 = vcmask 64512
    %v347 = vsel %vm345, %v343, 0
    %v350 = vsel %vm345, %v344, 0
    %352 = vmatprep.subr.mxu0 0.0
    %353 = vmatpush1.msra.mxu0 0.0
    %354 = vmatprep.subr.mxu0 0.0
    %355 = vmatpush1.msra.mxu0 0.0
    %356 = vmatprep.subr.mxu0 0.0
    %357 = vmatpush1.msra.mxu0 0.0
    %358 = vmatprep.subr.mxu0 0.0
    %359 = vmatpush1.msra.mxu0 0.0
    %360 = vmatprep.subr.mxu0 0.0
    %361 = vmatpush1.msra.mxu0 0.0
    %362 = vmatprep.subr.mxu0 0.0
    %363 = vmatpush1.msra.mxu0 0.0
    %364 = vmatprep.subr.mxu0 0.0
    %365 = vmatpush1.msra.mxu0 0.0
    %366 = vmatprep.subr.mxu0 0.0
    %367 = vmatpush1.msra.mxu0 0.0
    %368 = vmatprep.subr.mxu0 0.0
    %369 = vmatpush1.msra.mxu0 0.0
    %370 = vmatprep.subr.mxu0 0.0
    %371 = vmatpush1.msra.mxu0 0.0
    %372 = vmatprep.subr.mxu0 0.0
    %373 = vmatpush1.msra.mxu0 0.0
    %374 = vmatprep.subr.mxu0 0.0
    %375 = vmatpush1.msra.mxu0 0.0
    %376 = vmatprep.subr.mxu0 0.0
    %377 = vmatpush1.msra.mxu0 0.0
    %378 = vmatprep.subr.mxu0 0.0
    %379 = vmatpush1.msra.mxu0 0.0
    %380 = vmatprep.subr.mxu0 0.0
    %381 = vmatpush1.msra.mxu0 0.0
    %382 = vmatprep.subr.mxu0 0.0
    %383 = vmatpush1.msra.mxu0 %v337
    %384 = vmatprep.subr.mxu0 0.0
    %385 = vmatpush2.msra.mxu0 0.0
    %386 = vmatprep.subr.mxu0 0.0
    %387 = vmatpush2.msra.mxu0 0.0
    %388 = vmatprep.subr.mxu0 0.0
    %389 = vmatpush2.msra.mxu0 0.0
    %390 = vmatprep.subr.mxu0 0.0
    %391 = vmatpush2.msra.mxu0 0.0
    %392 = vmatprep.subr.mxu0 0.0
    %393 = vmatpush2.msra.mxu0 0.0
    %394 = vmatprep.subr.mxu0 0.0
    %395 = vmatpush2.msra.mxu0 0.0
    %396 = vmatprep.subr.mxu0 0.0
    %397 = vmatpush2.msra.mxu0 0.0
    %398 = vmatprep.subr.mxu0 0.0
    %399 = vmatpush2.msra.mxu0 0.0
    %400 = vmatprep.subr.mxu0 0.0
    %401 = vmatpush2.msra.mxu0 0.0
    %402 = vmatprep.subr.mxu0 0.0
    %403 = vmatpush2.msra.mxu0 0.0
    %404 = vmatprep.subr.mxu0 0.0
    %405 = vmatpush2.msra.mxu0 0.0
    %406 = vmatprep.subr.mxu0 0.0
    %407 = vmatpush2.msra.mxu0 0.0
    %408 = vmatprep.subr.mxu0 0.0
    %409 = vmatpush2.msra.mxu0 0.0
    %410 = vmatprep.subr.mxu0 0.0
    %411 = vmatpush2.msra.mxu0 0.0
    %412 = vmatprep.subr.mxu0 0.0
    %413 = vmatpush2.msra.mxu0 0.0
    %414 = vmatprep.subr.mxu0 0.0
    %415 = vmatpush2.msra.mxu0 0.0
    %416 = vmatprep.mubr.f32.mxu0 0.0
    %417 = vmatmul.mubr.f32.gmra.mxu0 %v347
    %v418 = vpop.f32.mrf.mxu0
    %v419 = vadd.f32 0.0, %v418
    %v420 = vpop.f32.mrf.mxu0
    %421 = vmatprep.mubr.f32.mxu0 0.0
    %422 = vmatmul.mubr.f32.gmra.mxu0 %v350
    %v423 = vpop.f32.mrf.mxu0
    %v424 = vadd.f32 0.0, %v423
    %v425 = vpop.f32.mrf.mxu0
    %426 = vdwg.mxu0
    %427 = vmatprep.subr.mxu0 0.0
    %428 = vmatpush1.msra.mxu0 0.0
    %429 = vmatprep.subr.mxu0 0.0
    %430 = vmatpush1.msra.mxu0 0.0
    %431 = vmatprep.subr.mxu0 0.0
    %432 = vmatpush1.msra.mxu0 0.0
    %433 = vmatprep.subr.mxu0 0.0
    %434 = vmatpush1.msra.mxu0 0.0
    %435 = vmatprep.subr.mxu0 0.0
    %436 = vmatpush1.msra.mxu0 0.0
    %437 = vmatprep.subr.mxu0 0.0
    %438 = vmatpush1.msra.mxu0 0.0
    %439 = vmatprep.subr.mxu0 0.0
    %440 = vmatpush1.msra.mxu0 0.0
    %441 = vmatprep.subr.mxu0 0.0
    %442 = vmatpush1.msra.mxu0 0.0
    %443 = vmatprep.subr.mxu0 0.0
    %444 = vmatpush1.msra.mxu0 0.0
    %445 = vmatprep.subr.mxu0 0.0
    %446 = vmatpush1.msra.mxu0 0.0
    %447 = vmatprep.subr.mxu0 0.0
    %448 = vmatpush1.msra.mxu0 0.0
    %449 = vmatprep.subr.mxu0 0.0
    %450 = vmatpush1.msra.mxu0 0.0
    %451 = vmatprep.subr.mxu0 0.0
    %452 = vmatpush1.msra.mxu0 0.0
    %453 = vmatprep.subr.mxu0 0.0
    %454 = vmatpush1.msra.mxu0 0.0
    %455 = vmatprep.subr.mxu0 0.0
    %456 = vmatpush1.msra.mxu0 0.0
    %457 = vmatprep.subr.mxu0 0.0
    %458 = vmatpush1.msra.mxu0 %v342
    %459 = vmatprep.subr.mxu0 0.0
    %460 = vmatpush2.msra.mxu0 0.0
    %461 = vmatprep.subr.mxu0 0.0
    %462 = vmatpush2.msra.mxu0 0.0
    %463 = vmatprep.subr.mxu0 0.0
    %464 = vmatpush2.msra.mxu0 0.0
    %465 = vmatprep.subr.mxu0 0.0
    %466 = vmatpush2.msra.mxu0 0.0
    %467 = vmatprep.subr.mxu0 0.0
    %468 = vmatpush2.msra.mxu0 0.0
    %469 = vmatprep.subr.mxu0 0.0
    %470 = vmatpush2.msra.mxu0 0.0
    %471 = vmatprep.subr.mxu0 0.0
    %472 = vmatpush2.msra.mxu0 0.0
    %473 = vmatprep.subr.mxu0 0.0
    %474 = vmatpush2.msra.mxu0 0.0
    %475 = vmatprep.subr.mxu0 0.0
    %476 = vmatpush2.msra.mxu0 0.0
    %477 = vmatprep.subr.mxu0 0.0
    %478 = vmatpush2.msra.mxu0 0.0
    %479 = vmatprep.subr.mxu0 0.0
    %480 = vmatpush2.msra.mxu0 0.0
    %481 = vmatprep.subr.mxu0 0.0
    %482 = vmatpush2.msra.mxu0 0.0
    %483 = vmatprep.subr.mxu0 0.0
    %484 = vmatpush2.msra.mxu0 0.0
    %485 = vmatprep.subr.mxu0 0.0
    %486 = vmatpush2.msra.mxu0 0.0
    %487 = vmatprep.subr.mxu0 0.0
    %488 = vmatpush2.msra.mxu0 0.0
    %489 = vmatprep.subr.mxu0 0.0
    %490 = vmatpush2.msra.mxu0 0.0
    %491 = vmatprep.mubr.f32.mxu0 0.0
    %492 = vmatmul.mubr.f32.gmra.mxu0 %v347
    %v493 = vpop.f32.mrf.mxu0
    %v494 = vadd.f32 0.0, %v493
    %v495 = vpop.f32.mrf.mxu0
    %496 = vmatprep.mubr.f32.mxu0 0.0
    %497 = vmatmul.mubr.f32.gmra.mxu0 %v350
    %v498 = vpop.f32.mrf.mxu0
    %v499 = vadd.f32 0.0, %v498
    %v500 = vpop.f32.mrf.mxu0
    %501 = vdwg.mxu0
    %v502 = vld [vmem:[%s3] sm:$0xff]
    %v503 = vld [vmem:[%s3 + $0x8] sm:$0xff]
    %505 = vset.pattern.permute.xlu0 0
    %506 = vperm.xlu0 %505, %v502
    %v507 = vpop.permute.xlu0 %506
    %510 = vset.pattern.permute.xlu0 0
    %511 = vperm.xlu0 %510, %v503
    %v512 = vpop.permute.xlu0 %511
    %v514 = vmul.f32 %v507, %v494
    %v515 = vmul.f32 %v512, %v499
    %v516 = vld [vmem:[%s4] sm:$0xff]
    %v517 = vld [vmem:[%s4 + $0x8] sm:$0xff]
    %v518 = vmul.f32 %v419, %v514
    %v519 = vmul.f32 %v424, %v515
    %521 = vset.pattern.permute.xlu0 0
    %522 = vperm.xlu0 %521, %v516
    %v523 = vpop.permute.xlu0 %522
    %526 = vset.pattern.permute.xlu0 0
    %527 = vperm.xlu0 %526, %v517
    %v528 = vpop.permute.xlu0 %527
    %v530 = vsub.f32 %v523, %v518
    %v531 = vsub.f32 %v528, %v519
    %v532 = vld [vmem:[%s9] sm:$0x3]
    %vm533 = vcmask 15360
    %v535 = vsel %vm533, %v514, 0
    %v538 = vsel %vm533, %v515, 0
    %v541 = vsel %vm533, %v530, 0
    %v544 = vsel %vm533, %v531, 0
    %vm546 = vcmask 1041408
    %v548 = vsel %vm546, %v532, 0
    %550 = vmatprep.subr.mxu0 0.0
    %551 = vmatpush1.msra.mxu0 0.0
    %552 = vmatprep.subr.mxu0 0.0
    %553 = vmatpush1.msra.mxu0 0.0
    %554 = vmatprep.subr.mxu0 0.0
    %555 = vmatpush1.msra.mxu0 0.0
    %556 = vmatprep.subr.mxu0 0.0
    %557 = vmatpush1.msra.mxu0 0.0
    %558 = vmatprep.subr.mxu0 0.0
    %559 = vmatpush1.msra.mxu0 0.0
    %560 = vmatprep.subr.mxu0 0.0
    %561 = vmatpush1.msra.mxu0 0.0
    %562 = vmatprep.subr.mxu0 0.0
    %563 = vmatpush1.msra.mxu0 0.0
    %564 = vmatprep.subr.mxu0 0.0
    %565 = vmatpush1.msra.mxu0 0.0
    %566 = vmatprep.subr.mxu0 0.0
    %567 = vmatpush1.msra.mxu0 0.0
    %568 = vmatprep.subr.mxu0 0.0
    %569 = vmatpush1.msra.mxu0 0.0
    %570 = vmatprep.subr.mxu0 0.0
    %571 = vmatpush1.msra.mxu0 0.0
    %572 = vmatprep.subr.mxu0 0.0
    %573 = vmatpush1.msra.mxu0 0.0
    %574 = vmatprep.subr.mxu0 0.0
    %575 = vmatpush1.msra.mxu0 0.0
    %576 = vmatprep.subr.mxu0 0.0
    %577 = vmatpush1.msra.mxu0 0.0
    %578 = vmatprep.subr.mxu0 0.0
    %579 = vmatpush1.msra.mxu0 0.0
    %580 = vmatprep.subr.mxu0 0.0
    %581 = vmatpush1.msra.mxu0 %v548
    %582 = vmatprep.subr.mxu0 0.0
    %583 = vmatpush2.msra.mxu0 0.0
    %584 = vmatprep.subr.mxu0 0.0
    %585 = vmatpush2.msra.mxu0 0.0
    %586 = vmatprep.subr.mxu0 0.0
    %587 = vmatpush2.msra.mxu0 0.0
    %588 = vmatprep.subr.mxu0 0.0
    %589 = vmatpush2.msra.mxu0 0.0
    %590 = vmatprep.subr.mxu0 0.0
    %591 = vmatpush2.msra.mxu0 0.0
    %592 = vmatprep.subr.mxu0 0.0
    %593 = vmatpush2.msra.mxu0 0.0
    %594 = vmatprep.subr.mxu0 0.0
    %595 = vmatpush2.msra.mxu0 0.0
    %596 = vmatprep.subr.mxu0 0.0
    %597 = vmatpush2.msra.mxu0 0.0
    %598 = vmatprep.subr.mxu0 0.0
    %599 = vmatpush2.msra.mxu0 0.0
    %600 = vmatprep.subr.mxu0 0.0
    %601 = vmatpush2.msra.mxu0 0.0
    %602 = vmatprep.subr.mxu0 0.0
    %603 = vmatpush2.msra.mxu0 0.0
    %604 = vmatprep.subr.mxu0 0.0
    %605 = vmatpush2.msra.mxu0 0.0
    %606 = vmatprep.subr.mxu0 0.0
    %607 = vmatpush2.msra.mxu0 0.0
    %608 = vmatprep.subr.mxu0 0.0
    %609 = vmatpush2.msra.mxu0 0.0
    %610 = vmatprep.subr.mxu0 0.0
    %611 = vmatpush2.msra.mxu0 0.0
    %612 = vmatprep.subr.mxu0 0.0
    %613 = vmatpush2.msra.mxu0 0.0
    %614 = vmatprep.mubr.f32.mxu0 0.0
    %615 = vmatmul.mubr.f32.gmra.mxu0 %v535
    %v616 = vpop.f32.mrf.mxu0
    %v617 = vadd.f32 0.0, %v616
    %v618 = vpop.f32.mrf.mxu0
    %619 = vmatprep.mubr.f32.mxu0 0.0
    %620 = vmatmul.mubr.f32.gmra.mxu0 %v538
    %v621 = vpop.f32.mrf.mxu0
    %v622 = vadd.f32 0.0, %v621
    %v623 = vpop.f32.mrf.mxu0
    %624 = vmatprep.mubr.f32.mxu0 0.0
    %625 = vmatmul.mubr.f32.gmra.mxu0 %v541
    %v626 = vpop.f32.mrf.mxu0
    %v627 = vadd.f32 0.0, %v626
    %v628 = vpop.f32.mrf.mxu0
    %629 = vmatprep.mubr.f32.mxu0 0.0
    %630 = vmatmul.mubr.f32.gmra.mxu0 %v544
    %v631 = vpop.f32.mrf.mxu0
    %v632 = vadd.f32 0.0, %v631
    %v633 = vpop.f32.mrf.mxu0
    %634 = vdwg.mxu0
    %v635 = vmul.f32 %v158, %v617
    %v636 = vmul.f32 %v163, %v622
    %v637 = vadd.f32 %v635, %v627
    %v638 = vadd.f32 %v636, %v632
    %v639 = vmin.f32 %v637, 20.0
    %v640 = vmin.f32 %v638, 20.0
    %v641 = vmul.f32 %v639, 1.442695
    %v642 = vpow.pop %v641
    %v643 = vmul.f32 %v640, 1.442695
    %v644 = vpow.pop %v643
    %v645 = vadd.f32 %v642, 2.0
    %v646 = vadd.f32 %v644, 2.0
    %v647 = vmul.f32 %v642, %v645
    %v648 = vmul.f32 %v644, %v646
    %v649 = vmul.f32 %v637, %v647
    %v650 = vmul.f32 %v638, %v648
    %v651 = vadd.f32 %v647, 2.0
    %v652 = vadd.f32 %v648, 2.0
    %v653 = vrcp.pop %v651
    %v654 = vrcp.pop %v652
    %v655 = vmul.f32 %v649, %v653
    %v656 = vmul.f32 %v650, %v654
    %657 = vst.msk [vmem:[#allocation2] sm:$0xff] %vm170, %v655
    %658 = vst.msk [vmem:[#allocation2 + $0x8] sm:$0xff] %vm170, %v656
    // Predicated region
    $region42: #{tpu_custom_call.1} parent=1 // pred_check
      _
    $region43: #{tpu_custom_call.1} parent=1 // pred_check_branch
      %660 = sbr.rel (0) target = $region45
    $region44: #{tpu_custom_call.1} parent=1 // pred_region
      %s662 = ssub.s32 256, 256
      %663 = vsyncadd [#allocation3], %s662
      %s664 = sshll.u32 [#allocation2], 4
      %s665 = int_to_ptr.vmem [resolvable:$true] %s664
      %670 = dma.vmem_to_hbm [thread:$0]  %s665, 256, %s10, [#allocation3], 128, 128, 8
    $region45: #{tpu_custom_call.1} parent=1 // pred_fallthru
      _
    // Predicated region
    $region46: #{tpu_custom_call.1} parent=1 // pred_check
      _
    $region47: #{tpu_custom_call.1} parent=1 // pred_check_branch
      %672 = sbr.rel (0) target = $region49
    $region48: #{tpu_custom_call.1} parent=1 // pred_region
      %673 = dma.done [#allocation3], 256
    $region49: #{tpu_custom_call.1} parent=1 // pred_fallthru
      _
    %674 = vsyncpa [#allocation3], 1

</llo_original>
